<compile_context>
chip_gen: v7x
topology: tpu7x:2x2x1
jax: 0.10.0
libtpu: 0.0.40
codegen_flags: <defaults>
</compile_context>

<pallas_src>
import jax
import jax.numpy as jnp
from jax.experimental import pallas as pl
from jax.experimental.pallas import tpu as pltpu

LANE = 128


def _round_up(x, m):
    return ((x + m - 1) // m) * m


def _pad_to(x, shape):
    return jnp.pad(x, [(0, s - d) for d, s in zip(x.shape, shape)])


# ----------------------------------------------------------------------------
# Fused kernel: per-hop (Linear->ReLU->Linear->ReLU) + head (Linear->ReLU->Linear)
# ----------------------------------------------------------------------------
def _sign_fused_kernel(x_ref, w1_ref, b1_ref, w2_ref, b2_ref,
                       w3_ref, b3_ref, w4_ref, b4_ref,
                       o_ref, acc_ref):
    h = pl.program_id(1)

    x = x_ref[0]                       # [tile_n, F]   bf16
    w1 = w1_ref[h]                     # [F, Hdp]      bf16 (VMEM-resident)
    b1 = b1_ref[h]                     # [1, Hdp]      f32
    w2 = w2_ref[h]                     # [Hdp, Hdp]    bf16
    b2 = b2_ref[h]                     # [1, Hdp]      f32
    w3 = w3_ref[h]                     # [Hdp, Hdp]    bf16 (block-row of W3)

    a = jnp.dot(x, w1, preferred_element_type=jnp.float32) + b1
    a = jnp.maximum(a, 0.0)
    a = jnp.dot(a.astype(w2.dtype), w2, preferred_element_type=jnp.float32) + b2
    a = jnp.maximum(a, 0.0)
    contrib = jnp.dot(a.astype(w3.dtype), w3, preferred_element_type=jnp.float32)

    @pl.when(h == 0)
    def _():
        acc_ref[...] = contrib          # first hop: direct store (no zero pass)

    @pl.when(h > 0)
    def _():
        acc_ref[...] += contrib         # xcat @ W3 accumulated hop by hop

    @pl.when(h == pl.num_programs(1) - 1)
    def _():
        z = jnp.maximum(acc_ref[...] + b3_ref[...], 0.0)
        y = jnp.dot(z.astype(w4_ref.dtype), w4_ref[...],
                    preferred_element_type=jnp.float32) + b4_ref[...]
        o_ref[...] = y.astype(o_ref.dtype)


# ----------------------------------------------------------------------------
# Wrapper: padding, tiling, single pallas_call
# ----------------------------------------------------------------------------
def sign_forward(xs, params, *, tile_n=512):
    """xs: [H, N, F] f32; params as produced by init_params -> [N, out_channels] f32."""
    H, N, F = xs.shape
    Hd = params["w2"].shape[-1]
    O = params["w4"].shape[-1]

    Hdp = _round_up(Hd, LANE)          # lane-dense hidden width
    Op = _round_up(O, LANE)            # lane-dense output width

    tile_n = _round_up(max(8, min(tile_n, _round_up(N, 8))), 8)
    Np = _round_up(N, tile_n)
    n_tiles = Np // tile_n

    dt = jnp.bfloat16

    # bf16 streams, zero-padded channels (zeros propagate exactly through the net)
    x_p = jnp.pad(xs, ((0, 0), (0, Np - N), (0, 0))).astype(dt)
    w1 = _pad_to(params["w1"], (H, F, Hdp)).astype(dt)
    b1 = _pad_to(params["b1"], (H, 1, Hdp)).astype(jnp.float32)
    w2 = _pad_to(params["w2"], (H, Hdp, Hdp)).astype(dt)
    b2 = _pad_to(params["b2"], (H, 1, Hdp)).astype(jnp.float32)
    w3 = _pad_to(params["w3"].reshape(H, Hd, Hd), (H, Hdp, Hdp)).astype(dt)
    b3 = _pad_to(params["b3"], (1, Hdp)).astype(jnp.float32)
    w4 = _pad_to(params["w4"], (Hdp, Op)).astype(dt)
    b4 = _pad_to(params["b4"], (1, Op)).astype(jnp.float32)

    flops = 2 * Np * H * (F * Hdp + 2 * Hdp * Hdp) + 2 * Np * Hdp * Op
    bytes_accessed = (x_p.size * 2 + w1.size * 2 + w2.size * 2 + w3.size * 2
                      + w4.size * 2 + b1.size * 4 + b2.size * 4 + b3.size * 4
                      + b4.size * 4 + Np * Op * 4)

    out = pl.pallas_call(
        _sign_fused_kernel,
        out_shape=jax.ShapeDtypeStruct((Np, Op), jnp.float32),
        grid_spec=pltpu.PrefetchScalarGridSpec(
            num_scalar_prefetch=0,
            grid=(n_tiles, H),                                   # H last = reduction
            in_specs=[
                pl.BlockSpec((1, tile_n, F), lambda i, h: (h, i, 0)),   # x tile (per hop)
                pl.BlockSpec((H, F, Hdp), lambda i, h: (0, 0, 0)),      # w1 resident
                pl.BlockSpec((H, 1, Hdp), lambda i, h: (0, 0, 0)),      # b1 resident
                pl.BlockSpec((H, Hdp, Hdp), lambda i, h: (0, 0, 0)),    # w2 resident
                pl.BlockSpec((H, 1, Hdp), lambda i, h: (0, 0, 0)),      # b2 resident
                pl.BlockSpec((H, Hdp, Hdp), lambda i, h: (0, 0, 0)),    # w3 resident
                pl.BlockSpec((1, Hdp), lambda i, h: (0, 0)),            # b3 resident
                pl.BlockSpec((Hdp, Op), lambda i, h: (0, 0)),           # w4 resident
                pl.BlockSpec((1, Op), lambda i, h: (0, 0)),             # b4 resident
            ],
            out_specs=pl.BlockSpec((tile_n, Op), lambda i, h: (i, 0)),  # same tile over h
            scratch_shapes=[pltpu.VMEM((tile_n, Hdp), jnp.float32)],    # acc
        ),
        compiler_params=pltpu.CompilerParams(
            dimension_semantics=("parallel", "arbitrary"),
            vmem_limit_bytes=64 * 1024 * 1024,
        ),
        cost_estimate=pl.CostEstimate(
            flops=flops, transcendentals=0, bytes_accessed=bytes_accessed),
    )(x_p, w1, b1, w2, b2, w3, b3, w4, b4)

    return out[:N, :O]


# ----------------------------------------------------------------------------
# Params + pure-JAX reference
# ----------------------------------------------------------------------------
def init_params(key, in_channels, hidden_channels, out_channels, num_hops):
    ks = jax.random.split(key, 8)
    s = 0.05
    return {
        "w1": s * jax.random.normal(ks[0], (num_hops, in_channels, hidden_channels), jnp.float32),
        "b1": s * jax.random.normal(ks[1], (num_hops, 1, hidden_channels), jnp.float32),
        "w2": s * jax.random.normal(ks[2], (num_hops, hidden_channels, hidden_channels), jnp.float32),
        "b2": s * jax.random.normal(ks[3], (num_hops, 1, hidden_channels), jnp.float32),
        "w3": s * jax.random.normal(ks[4], (num_hops * hidden_channels, hidden_channels), jnp.float32),
        "b3": s * jax.random.normal(ks[5], (1, hidden_channels), jnp.float32),
        "w4": s * jax.random.normal(ks[6], (hidden_channels, out_channels), jnp.float32),
        "b4": s * jax.random.normal(ks[7], (1, out_channels), jnp.float32),
    }


def reference_forward(xs, params):
    outs = []
    for h in range(xs.shape[0]):
        a = jnp.maximum(xs[h] @ params["w1"][h] + params["b1"][h], 0.0)
        a = jnp.maximum(a @ params["w2"][h] + params["b2"][h], 0.0)
        outs.append(a)
    xcat = jnp.concatenate(outs, axis=-1)
    hdd = jnp.maximum(xcat @ params["w3"] + params["b3"], 0.0)
    return hdd @ params["w4"] + params["b4"]


if __name__ == "__main__":
    num_hops = 3
    N = 200              # nodes (not a tile multiple -> exercises padding)
    in_channels = 32
    hidden_channels = 32
    out_channels = 16

    key = jax.random.PRNGKey(0)
    kx, kp = jax.random.split(key)
    xs = jax.random.normal(kx, (num_hops, N, in_channels), jnp.float32)
    params = init_params(kp, in_channels, hidden_channels, out_channels, num_hops)

    out = sign_forward(xs, params, tile_n=64)   # grid = (4, 3)
    out = jax.block_until_ready(out)

    # Reference on the same bf16-rounded streams (f32 math), looser tolerance for bf16.
    xs_b = xs.astype(jnp.bfloat16).astype(jnp.float32)
    params_b = {k: (v.astype(jnp.bfloat16).astype(jnp.float32) if k.startswith("w") else v)
                for k, v in params.items()}
    ref = reference_forward(xs_b, params_b)

    assert out.shape == (N, out_channels), out.shape
    assert jnp.allclose(out, ref, atol=3e-2, rtol=3e-2), \
        f"mismatch vs reference, max abs diff = {jnp.max(jnp.abs(out - ref))}"

    print("KERNEL_OK")
</pallas_src>

<mosaic_0001>
module attributes {stable_mosaic.version = 11 : i64} {
  func.func @_sign_fused_kernel(%arg0: i32, %arg1: i32, %arg2: memref<1x64x32xbf16, #tpu.memory_space<vmem>>, %arg3: memref<3x32x128xbf16, #tpu.memory_space<vmem>>, %arg4: memref<3x1x128xf32, #tpu.memory_space<vmem>>, %arg5: memref<3x128x128xbf16, #tpu.memory_space<vmem>>, %arg6: memref<3x1x128xf32, #tpu.memory_space<vmem>>, %arg7: memref<3x128x128xbf16, #tpu.memory_space<vmem>>, %arg8: memref<1x128xf32, #tpu.memory_space<vmem>>, %arg9: memref<128x128xbf16, #tpu.memory_space<vmem>>, %arg10: memref<1x128xf32, #tpu.memory_space<vmem>>, %arg11: memref<64x128xf32, #tpu.memory_space<vmem>>, %arg12: memref<64x128xf32, #tpu.memory_space<vmem>>) attributes {dimension_semantics = [#tpu.dimension_semantics<parallel>, #tpu.dimension_semantics<arbitrary>], iteration_bounds = array<i64: 4, 3>, scalar_prefetch = 0 : i64, scratch_operands = 1 : i64, tpu.core_type = #tpu.core_type<tc>, window_params = [{transform_indices = @transform_0, window_bounds = array<i64: 1, 64, 32>}, {pipeline_mode = #tpu.pipeline_mode<synchronous>, transform_indices = @transform_1, window_bounds = array<i64: 3, 32, 128>}, {pipeline_mode = #tpu.pipeline_mode<synchronous>, transform_indices = @transform_2, window_bounds = array<i64: 3, 1, 128>}, {pipeline_mode = #tpu.pipeline_mode<synchronous>, transform_indices = @transform_3, window_bounds = array<i64: 3, 128, 128>}, {pipeline_mode = #tpu.pipeline_mode<synchronous>, transform_indices = @transform_4, window_bounds = array<i64: 3, 1, 128>}, {pipeline_mode = #tpu.pipeline_mode<synchronous>, transform_indices = @transform_5, window_bounds = array<i64: 3, 128, 128>}, {pipeline_mode = #tpu.pipeline_mode<synchronous>, transform_indices = @transform_6, window_bounds = array<i64: 1, 128>}, {pipeline_mode = #tpu.pipeline_mode<synchronous>, transform_indices = @transform_7, window_bounds = array<i64: 128, 128>}, {pipeline_mode = #tpu.pipeline_mode<synchronous>, transform_indices = @transform_8, window_bounds = array<i64: 1, 128>}, {transform_indices = @transform_9, window_bounds = array<i64: 64, 128>}]} {
    %c0 = arith.constant 0 : index
    %c0_0 = arith.constant 0 : index
    %c0_1 = arith.constant 0 : index
    %0 = vector.load %arg2[%c0, %c0_0, %c0_1] : memref<1x64x32xbf16, #tpu.memory_space<vmem>>, vector<1x64x32xbf16>
    %1 = vector.shape_cast %0 : vector<1x64x32xbf16> to vector<64x32xbf16>
    %2 = arith.index_cast %arg1 : i32 to index
    %c0_2 = arith.constant 0 : index
    %c0_3 = arith.constant 0 : index
    %3 = vector.load %arg3[%2, %c0_2, %c0_3] : memref<3x32x128xbf16, #tpu.memory_space<vmem>>, vector<1x32x128xbf16>
    %4 = vector.shape_cast %3 : vector<1x32x128xbf16> to vector<32x128xbf16>
    %5 = arith.index_cast %arg1 : i32 to index
    %c0_4 = arith.constant 0 : index
    %c0_5 = arith.constant 0 : index
    %6 = vector.load %arg4[%5, %c0_4, %c0_5] : memref<3x1x128xf32, #tpu.memory_space<vmem>>, vector<1x1x128xf32>
    %7 = vector.shape_cast %6 : vector<1x1x128xf32> to vector<1x128xf32>
    %8 = arith.index_cast %arg1 : i32 to index
    %c0_6 = arith.constant 0 : index
    %c0_7 = arith.constant 0 : index
    %9 = vector.load %arg5[%8, %c0_6, %c0_7] : memref<3x128x128xbf16, #tpu.memory_space<vmem>>, vector<1x128x128xbf16>
    %10 = vector.shape_cast %9 : vector<1x128x128xbf16> to vector<128x128xbf16>
    %11 = arith.index_cast %arg1 : i32 to index
    %c0_8 = arith.constant 0 : index
    %c0_9 = arith.constant 0 : index
    %12 = vector.load %arg6[%11, %c0_8, %c0_9] : memref<3x1x128xf32, #tpu.memory_space<vmem>>, vector<1x1x128xf32>
    %13 = vector.shape_cast %12 : vector<1x1x128xf32> to vector<1x128xf32>
    %14 = arith.index_cast %arg1 : i32 to index
    %c0_10 = arith.constant 0 : index
    %c0_11 = arith.constant 0 : index
    %15 = vector.load %arg7[%14, %c0_10, %c0_11] : memref<3x128x128xbf16, #tpu.memory_space<vmem>>, vector<1x128x128xbf16>
    %16 = vector.shape_cast %15 : vector<1x128x128xbf16> to vector<128x128xbf16>
    %cst = arith.constant dense<0.000000e+00> : vector<64x128xf32>
    %17 = tpu.matmul %1, %4, %cst {dimension_numbers = #tpu.dot_dimension_numbers<[1], [0], [0], [1], [0, 0, 1, 1], [], []>} : vector<64x32xbf16>, vector<32x128xbf16>, vector<64x128xf32> -> vector<64x128xf32>
    %18 = vector.broadcast %7 : vector<1x128xf32> to vector<64x128xf32>
    %19 = arith.addf %17, %18 : vector<64x128xf32>
    %cst_12 = arith.constant 0.000000e+00 : f32
    %20 = vector.broadcast %cst_12 : f32 to vector<64x128xf32>
    %21 = arith.maximumf %19, %20 : vector<64x128xf32>
    %22 = arith.truncf %21 : vector<64x128xf32> to vector<64x128xbf16>
    %cst_13 = arith.constant dense<0.000000e+00> : vector<64x128xf32>
    %23 = tpu.matmul %22, %10, %cst_13 {dimension_numbers = #tpu.dot_dimension_numbers<[1], [0], [0], [1], [0, 0, 1, 1], [], []>} : vector<64x128xbf16>, vector<128x128xbf16>, vector<64x128xf32> -> vector<64x128xf32>
    %24 = vector.broadcast %13 : vector<1x128xf32> to vector<64x128xf32>
    %25 = arith.addf %23, %24 : vector<64x128xf32>
    %cst_14 = arith.constant 0.000000e+00 : f32
    %26 = vector.broadcast %cst_14 : f32 to vector<64x128xf32>
    %27 = arith.maximumf %25, %26 : vector<64x128xf32>
    %28 = arith.truncf %27 : vector<64x128xf32> to vector<64x128xbf16>
    %cst_15 = arith.constant dense<0.000000e+00> : vector<64x128xf32>
    %29 = tpu.matmul %28, %16, %cst_15 {dimension_numbers = #tpu.dot_dimension_numbers<[1], [0], [0], [1], [0, 0, 1, 1], [], []>} : vector<64x128xbf16>, vector<128x128xbf16>, vector<64x128xf32> -> vector<64x128xf32>
    %c0_i32 = arith.constant 0 : i32
    %30 = arith.cmpi eq, %arg1, %c0_i32 : i32
    %31 = arith.extui %30 : i1 to i32
    %c0_i32_16 = arith.constant 0 : i32
    %32 = arith.cmpi ne, %31, %c0_i32_16 : i32
    scf.if %32 {
      %c0_20 = arith.constant 0 : index
      %c0_21 = arith.constant 0 : index
      %39 = vector.load %arg12[%c0_20, %c0_21] : memref<64x128xf32, #tpu.memory_space<vmem>>, vector<64x128xf32>
      tpu.vector_store %arg12[%c0_20, %c0_21], %29 {strides = array<i32>} : memref<64x128xf32, #tpu.memory_space<vmem>>, vector<64x128xf32>,
    } else {
    }
    %c0_i32_17 = arith.constant 0 : i32
    %33 = arith.cmpi sgt, %arg1, %c0_i32_17 : i32
    %34 = arith.extui %33 : i1 to i32
    %c0_i32_18 = arith.constant 0 : i32
    %35 = arith.cmpi ne, %34, %c0_i32_18 : i32
    scf.if %35 {
      %c0_20 = arith.constant 0 : index
      %c0_21 = arith.constant 0 : index
      %39 = vector.load %arg12[%c0_20, %c0_21] : memref<64x128xf32, #tpu.memory_space<vmem>>, vector<64x128xf32>
      %40 = arith.addf %39, %29 : vector<64x128xf32>
      %c0_22 = arith.constant 0 : index
      %c0_23 = arith.constant 0 : index
      %41 = vector.load %arg12[%c0_22, %c0_23] : memref<64x128xf32, #tpu.memory_space<vmem>>, vector<64x128xf32>
      tpu.vector_store %arg12[%c0_22, %c0_23], %40 {strides = array<i32>} : memref<64x128xf32, #tpu.memory_space<vmem>>, vector<64x128xf32>,
    } else {
    }
    %c2_i32 = arith.constant 2 : i32
    %36 = arith.cmpi eq, %arg1, %c2_i32 : i32
    %37 = arith.extui %36 : i1 to i32
    %c0_i32_19 = arith.constant 0 : i32
    %38 = arith.cmpi ne, %37, %c0_i32_19 : i32
    scf.if %38 {
      %c0_20 = arith.constant 0 : index
      %c0_21 = arith.constant 0 : index
      %39 = vector.load %arg12[%c0_20, %c0_21] : memref<64x128xf32, #tpu.memory_space<vmem>>, vector<64x128xf32>
      %c0_22 = arith.constant 0 : index
      %c0_23 = arith.constant 0 : index
      %40 = vector.load %arg8[%c0_22, %c0_23] : memref<1x128xf32, #tpu.memory_space<vmem>>, vector<1x128xf32>
      %41 = vector.broadcast %40 : vector<1x128xf32> to vector<64x128xf32>
      %42 = arith.addf %39, %41 : vector<64x128xf32>
      %cst_24 = arith.constant 0.000000e+00 : f32
      %43 = vector.broadcast %cst_24 : f32 to vector<64x128xf32>
      %44 = arith.maximumf %42, %43 : vector<64x128xf32>
      %45 = arith.truncf %44 : vector<64x128xf32> to vector<64x128xbf16>
      %c0_25 = arith.constant 0 : index
      %c0_26 = arith.constant 0 : index
      %46 = vector.load %arg9[%c0_25, %c0_26] : memref<128x128xbf16, #tpu.memory_space<vmem>>, vector<128x128xbf16>
      %cst_27 = arith.constant dense<0.000000e+00> : vector<64x128xf32>
      %47 = tpu.matmul %45, %46, %cst_27 {dimension_numbers = #tpu.dot_dimension_numbers<[1], [0], [0], [1], [0, 0, 1, 1], [], []>} : vector<64x128xbf16>, vector<128x128xbf16>, vector<64x128xf32> -> vector<64x128xf32>
      %c0_28 = arith.constant 0 : index
      %c0_29 = arith.constant 0 : index
      %48 = vector.load %arg10[%c0_28, %c0_29] : memref<1x128xf32, #tpu.memory_space<vmem>>, vector<1x128xf32>
      %49 = vector.broadcast %48 : vector<1x128xf32> to vector<64x128xf32>
      %50 = arith.addf %47, %49 : vector<64x128xf32>
      %c0_30 = arith.constant 0 : index
      %c0_31 = arith.constant 0 : index
      %51 = vector.load %arg11[%c0_30, %c0_31] : memref<64x128xf32, #tpu.memory_space<vmem>>, vector<64x128xf32>
      tpu.vector_store %arg11[%c0_30, %c0_31], %50 {strides = array<i32>} : memref<64x128xf32, #tpu.memory_space<vmem>>, vector<64x128xf32>,
    } else {
    }
    return
  }
  func.func @transform_0(%arg0: i32, %arg1: i32) -> (i32, i32, i32) {
    %c0_i32 = arith.constant 0 : i32
    %c0_i32_0 = arith.constant 0 : i32
    return %arg1, %arg0, %c0_i32 : i32, i32, i32
  }
  func.func @transform_1(%arg0: i32, %arg1: i32) -> (i32, i32, i32) {
    %c0_i32 = arith.constant 0 : i32
    %c0_i32_0 = arith.constant 0 : i32
    %c0_i32_1 = arith.constant 0 : i32
    %c0_i32_2 = arith.constant 0 : i32
    return %c0_i32, %c0_i32_0, %c0_i32_1 : i32, i32, i32
  }
  func.func @transform_2(%arg0: i32, %arg1: i32) -> (i32, i32, i32) {
    %c0_i32 = arith.constant 0 : i32
    %c0_i32_0 = arith.constant 0 : i32
    %c0_i32_1 = arith.constant 0 : i32
    %c0_i32_2 = arith.constant 0 : i32
    return %c0_i32, %c0_i32_0, %c0_i32_1 : i32, i32, i32
  }
  func.func @transform_3(%arg0: i32, %arg1: i32) -> (i32, i32, i32) {
    %c0_i32 = arith.constant 0 : i32
    %c0_i32_0 = arith.constant 0 : i32
    %c0_i32_1 = arith.constant 0 : i32
    %c0_i32_2 = arith.constant 0 : i32
    return %c0_i32, %c0_i32_0, %c0_i32_1 : i32, i32, i32
  }
  func.func @transform_4(%arg0: i32, %arg1: i32) -> (i32, i32, i32) {
    %c0_i32 = arith.constant 0 : i32
    %c0_i32_0 = arith.constant 0 : i32
    %c0_i32_1 = arith.constant 0 : i32
    %c0_i32_2 = arith.constant 0 : i32
    return %c0_i32, %c0_i32_0, %c0_i32_1 : i32, i32, i32
  }
  func.func @transform_5(%arg0: i32, %arg1: i32) -> (i32, i32, i32) {
    %c0_i32 = arith.constant 0 : i32
    %c0_i32_0 = arith.constant 0 : i32
    %c0_i32_1 = arith.constant 0 : i32
    %c0_i32_2 = arith.constant 0 : i32
    return %c0_i32, %c0_i32_0, %c0_i32_1 : i32, i32, i32
  }
  func.func @transform_6(%arg0: i32, %arg1: i32) -> (i32, i32) {
    %c0_i32 = arith.constant 0 : i32
    %c0_i32_0 = arith.constant 0 : i32
    %c0_i32_1 = arith.constant 0 : i32
    return %c0_i32, %c0_i32_0 : i32, i32
  }
  func.func @transform_7(%arg0: i32, %arg1: i32) -> (i32, i32) {
    %c0_i32 = arith.constant 0 : i32
    %c0_i32_0 = arith.constant 0 : i32
    %c0_i32_1 = arith.constant 0 : i32
    return %c0_i32, %c0_i32_0 : i32, i32
  }
  func.func @transform_8(%arg0: i32, %arg1: i32) -> (i32, i32) {
    %c0_i32 = arith.constant 0 : i32
    %c0_i32_0 = arith.constant 0 : i32
    %c0_i32_1 = arith.constant 0 : i32
    return %c0_i32, %c0_i32_0 : i32, i32
  }
  func.func @transform_9(%arg0: i32, %arg1: i32) -> (i32, i32) {
    %c0_i32 = arith.constant 0 : i32
    %c0_i32_0 = arith.constant 0 : i32
    return %arg0, %c0_i32 : i32, i32
  }
}

</mosaic_0001>

<llo_original>
// kernel: tpu_custom_call.1
$region0: #{tpu_custom_call.1}
  #allocation0 [shape = 'u32[]', space=smem, size = 0x4, offset = 0x4, fixed_abs, tag = 'smem constant byte address 0x4 - core index']
  #allocation1 [shape = 'u32[144,128]{1,0:T(1,128)}', space=vmem, size = 0x12000, scoped, tag = 'internal scratch']
  #allocation2 [shape = 'f32[64,128]{1,0:T(8,128)}', space=vmem, size = 0x8000, scoped, tag = 'scratch operand']
  %s0 = inlined_call_operand.hbm [shape: bf16[3,256,32], index: 0, kind: input, shape index: {}]
  %s1 = inlined_call_operand.hbm [shape: bf16[3,32,128], index: 1, kind: input, shape index: {}]
  %s2 = inlined_call_operand.hbm [shape: f32[3,1,128], index: 2, kind: input, shape index: {}]
  %s3 = inlined_call_operand.hbm [shape: bf16[3,128,128], index: 3, kind: input, shape index: {}]
  %s4 = inlined_call_operand.hbm [shape: f32[3,1,128], index: 4, kind: input, shape index: {}]
  %s5 = inlined_call_operand.hbm [shape: bf16[3,128,128], index: 5, kind: input, shape index: {}]
  %s6 = inlined_call_operand.hbm [shape: f32[1,128], index: 6, kind: input, shape index: {}]
  %s7 = inlined_call_operand.hbm [shape: bf16[128,128], index: 7, kind: input, shape index: {}]
  %s8 = inlined_call_operand.hbm [shape: f32[1,128], index: 8, kind: input, shape index: {}]
  %s9 = inlined_call_operand.hbm [shape: f32[256,128], index: 9, kind: output, shape index: {}]
  %s10 = sld [smem:[#allocation0]]
  $region117: #{tpu_custom_call.1} parent=0
    _
  %s12 = ssub.s32 1, %s10
  %s13 = scalar_select 0, %s12, %s10
  $region1: #{tpu_custom_call.1} parent=0
    #allocation3 [shape = 'u8[32768]{0}', space=vmem, size = 0x8000, scoped, tag = 'input window, operand 0']
    #allocation4 [shape = 's32[2]{0}', space=sflag, size = 0x8, scoped, tag = 'scoped memory for tpu_custom_call.1']
    #allocation5 [shape = 's32[2]{0}', space=sflag, size = 0x8, scoped, tag = 'scoped memory for tpu_custom_call.1']
    #allocation6 [shape = 'u8[24576]{0}', space=vmem, size = 0x6000, scoped, tag = 'input window, operand 1, single buffered']
    #allocation7 [shape = 's32[1]{0}', space=sflag, size = 0x4, scoped, tag = 'scoped memory for tpu_custom_call.1']
    #allocation8 [shape = 'u8[1536]{0}', space=vmem, size = 0x800, scoped, tag = 'input window, operand 2, single buffered']
    #allocation9 [shape = 'u8[98304]{0}', space=vmem, size = 0x18000, scoped, tag = 'input window, operand 3, single buffered']
    #allocation10 [shape = 's32[1]{0}', space=sflag, size = 0x4, scoped, tag = 'scoped memory for tpu_custom_call.1']
    #allocation11 [shape = 'u8[1536]{0}', space=vmem, size = 0x800, scoped, tag = 'input window, operand 4, single buffered']
    #allocation12 [shape = 'u8[98304]{0}', space=vmem, size = 0x18000, scoped, tag = 'input window, operand 5, single buffered']
    #allocation13 [shape = 's32[1]{0}', space=sflag, size = 0x4, scoped, tag = 'scoped memory for tpu_custom_call.1']
    #allocation14 [shape = 'u8[512]{0}', space=vmem, size = 0x400, scoped, tag = 'input window, operand 6, single buffered']
    #allocation15 [shape = 'u8[32768]{0}', space=vmem, size = 0x8000, scoped, tag = 'input window, operand 7, single buffered']
    #allocation16 [shape = 's32[1]{0}', space=sflag, size = 0x4, scoped, tag = 'scoped memory for tpu_custom_call.1']
    #allocation17 [shape = 'u8[512]{0}', space=vmem, size = 0x400, scoped, tag = 'input window, operand 8, single buffered']
    #allocation18 [shape = 'u8[65536]{0}', space=vmem, size = 0x10000, scoped, tag = 'output window, operand 0']
    %14 = vsyncpa [#allocation4], 0
    %s15 = scalar_lea.sflag [#allocation4], 1
    %16 = vsyncpa %s15, 0
    %17 = vsyncpa [#allocation7], 0
    %18 = vsyncpa [#allocation10], 0
    %19 = vsyncpa [#allocation13], 0
    %20 = vsyncpa [#allocation16], 0
    %21 = vsyncpa [#allocation5], 0
    %s22 = scalar_lea.sflag [#allocation5], 1
    %23 = vsyncpa %s22, 0
    loop: start=0, step=1, limit=14
    $region2: #{tpu_custom_call.1} parent=1 // loop_pre_header
      _
    $region3: #{tpu_custom_call.1} parent=1 // loop_header
      %s25 = sphi 0, %s29
      %p26 = scmp.ge.s32.totalorder %s25, 14
      %s32 = sphi 0, %s44
      %s33 = sphi 0, %s40
      %s34 = sphi 0, %s32
      %s35 = sphi 0, %s33
      %s36 = sphi 0, %s34
      %s37 = sphi 0, %s35
      %s49 = sphi 0, %s51
      %s52 = sphi 0, %s49
      %s53 = sphi 0, %s52
      %s69 = sphi 0, %s53
      %s73 = sphi 0, %s73
      %s75 = sphi 0, %s73
      %s76 = sphi 0, %s75
      %s90 = sphi 0, %s76
      %s94 = sphi 0, %s94
      %s96 = sphi 0, %s94
      %s97 = sphi 0, %s96
      %s111 = sphi 0, %s97
      %s115 = sphi 0, %s115
      %s117 = sphi 0, %s115
      %s118 = sphi 0, %s117
      %s132 = sphi 0, %s118
      %s136 = sphi 0, %s136
      %s138 = sphi 0, %s136
      %s139 = sphi 0, %s138
      %s153 = sphi 0, %s139
      %s157 = sphi 0, %s157
      %s159 = sphi 0, %s157
      %s160 = sphi 0, %s159
      %s174 = sphi 0, %s160
      %s178 = sphi 0, %s178
      %s180 = sphi 0, %s178
      %s181 = sphi 0, %s180
      %s195 = sphi 0, %s181
      %s199 = sphi 0, %s199
      %s201 = sphi 0, %s199
      %s202 = sphi 0, %s201
      %s216 = sphi 0, %s202
      %s220 = sphi 0, %s220
      %s222 = sphi 0, %s220
      %s223 = sphi 0, %s222
      %s237 = sphi 0, %s223
      %s243 = sphi 0, %s245
      %s246 = sphi 0, %s243
      %s247 = sphi 0, %s246
      %s263 = sphi 0, %s247
    $region4: #{tpu_custom_call.1} parent=1 // loop_header_branch
      %28 = sbr.rel (%p26) target = $region8
    $region5: #{tpu_custom_call.1} parent=1 // loop_body
      %s30 = ssub.s32 %s25, 1
      %s31 = ssub.s32 %s25, 2
      %s38 = sadd.s32 1, %s33
      %p39 = scmp.ge.s32.totalorder %s38, 3
      %s40 = scalar_select %p39, 0, %s38
      %s41 = sadd.s32 1, %s32
      %s42 = scalar_select %p39, %s41, %s32
      %p43 = scmp.ge.s32.totalorder %s42, 4
      %s44 = scalar_select %p43, 0, %s42
      %s45 = ssub.s32 %s33, %s40
      %s46 = ssub.s32 %s32, %s44
      %s47 = sor.u32 %s45, %s46
      %p48 = scmp.eq.s32.totalorder %s47, 0
      %s50 = sadd.s32 %s49, 1
      %s51 = scalar_select %p48, %s49, %s50
      %p54 = pneg %p48
      %p55 = scmp.eq.s32.totalorder %s25, 11
      %p56 = por %p54, %p55
      %p57 = scmp.ne.s32.totalorder %s49, %s52
      %p58 = scmp.eq.s32.totalorder %s25, 0
      %p59 = por %p57, %p58
      %p60 = scmp.ne.s32.totalorder %s49, %s52
      %p61 = scmp.eq.s32.totalorder %s30, 11
      %p62 = por %p60, %p61
      %p63 = scmp.ne.s32.totalorder %s52, %s53
      %p64 = scmp.eq.s32.totalorder %s30, 0
      %p65 = por %p63, %p64
      %p66 = scmp.ne.s32.totalorder %s52, %s53
      %p67 = scmp.eq.s32.totalorder %s31, 11
      %p68 = por %p66, %p67
      %p70 = scmp.ne.s32.totalorder %s53, %s69
      %p71 = scmp.eq.s32.totalorder %s31, 0
      %p72 = por %p70, %p71
      %s74 = sadd.s32 %s73, 1
      %p77 = scmp.eq.s32.totalorder %s25, 11
      %p78 = scmp.ne.s32.totalorder %s73, %s75
      %p79 = scmp.eq.s32.totalorder %s25, 0
      %p80 = por %p78, %p79
      %p81 = scmp.ne.s32.totalorder %s73, %s75
      %p82 = scmp.eq.s32.totalorder %s30, 11
      %p83 = por %p81, %p82
      %p84 = scmp.ne.s32.totalorder %s75, %s76
      %p85 = scmp.eq.s32.totalorder %s30, 0
      %p86 = por %p84, %p85
      %p87 = scmp.ne.s32.totalorder %s75, %s76
      %p88 = scmp.eq.s32.totalorder %s31, 11
      %p89 = por %p87, %p88
      %p91 = scmp.ne.s32.totalorder %s76, %s90
      %p92 = scmp.eq.s32.totalorder %s31, 0
      %p93 = por %p91, %p92
      %s95 = sadd.s32 %s94, 1
      %p98 = scmp.eq.s32.totalorder %s25, 11
      %p99 = scmp.ne.s32.totalorder %s94, %s96
      %p100 = scmp.eq.s32.totalorder %s25, 0
      %p101 = por %p99, %p100
      %p102 = scmp.ne.s32.totalorder %s94, %s96
      %p103 = scmp.eq.s32.totalorder %s30, 11
      %p104 = por %p102, %p103
      %p105 = scmp.ne.s32.totalorder %s96, %s97
      %p106 = scmp.eq.s32.totalorder %s30, 0
      %p107 = por %p105, %p106
      %p108 = scmp.ne.s32.totalorder %s96, %s97
      %p109 = scmp.eq.s32.totalorder %s31, 11
      %p110 = por %p108, %p109
      %p112 = scmp.ne.s32.totalorder %s97, %s111
      %p113 = scmp.eq.s32.totalorder %s31, 0
      %p114 = por %p112, %p113
      %s116 = sadd.s32 %s115, 1
      %p119 = scmp.eq.s32.totalorder %s25, 11
      %p120 = scmp.ne.s32.totalorder %s115, %s117
      %p121 = scmp.eq.s32.totalorder %s25, 0
      %p122 = por %p120, %p121
      %p123 = scmp.ne.s32.totalorder %s115, %s117
      %p124 = scmp.eq.s32.totalorder %s30, 11
      %p125 = por %p123, %p124
      %p126 = scmp.ne.s32.totalorder %s117, %s118
      %p127 = scmp.eq.s32.totalorder %s30, 0
      %p128 = por %p126, %p127
      %p129 = scmp.ne.s32.totalorder %s117, %s118
      %p130 = scmp.eq.s32.totalorder %s31, 11
      %p131 = por %p129, %p130
      %p133 = scmp.ne.s32.totalorder %s118, %s132
      %p134 = scmp.eq.s32.totalorder %s31, 0
      %p135 = por %p133, %p134
      %s137 = sadd.s32 %s136, 1
      %p140 = scmp.eq.s32.totalorder %s25, 11
      %p141 = scmp.ne.s32.totalorder %s136, %s138
      %p142 = scmp.eq.s32.totalorder %s25, 0
      %p143 = por %p141, %p142
      %p144 = scmp.ne.s32.totalorder %s136, %s138
      %p145 = scmp.eq.s32.totalorder %s30, 11
      %p146 = por %p144, %p145
      %p147 = scmp.ne.s32.totalorder %s138, %s139
      %p148 = scmp.eq.s32.totalorder %s30, 0
      %p149 = por %p147, %p148
      %p150 = scmp.ne.s32.totalorder %s138, %s139
      %p151 = scmp.eq.s32.totalorder %s31, 11
      %p152 = por %p150, %p151
      %p154 = scmp.ne.s32.totalorder %s139, %s153
      %p155 = scmp.eq.s32.totalorder %s31, 0
      %p156 = por %p154, %p155
      %s158 = sadd.s32 %s157, 1
      %p161 = scmp.eq.s32.totalorder %s25, 11
      %p162 = scmp.ne.s32.totalorder %s157, %s159
      %p163 = scmp.eq.s32.totalorder %s25, 0
      %p164 = por %p162, %p163
      %p165 = scmp.ne.s32.totalorder %s157, %s159
      %p166 = scmp.eq.s32.totalorder %s30, 11
      %p167 = por %p165, %p166
      %p168 = scmp.ne.s32.totalorder %s159, %s160
      %p169 = scmp.eq.s32.totalorder %s30, 0
      %p170 = por %p168, %p169
      %p171 = scmp.ne.s32.totalorder %s159, %s160
      %p172 = scmp.eq.s32.totalorder %s31, 11
      %p173 = por %p171, %p172
      %p175 = scmp.ne.s32.totalorder %s160, %s174
      %p176 = scmp.eq.s32.totalorder %s31, 0
      %p177 = por %p175, %p176
      %s179 = sadd.s32 %s178, 1
      %p182 = scmp.eq.s32.totalorder %s25, 11
      %p183 = scmp.ne.s32.totalorder %s178, %s180
      %p184 = scmp.eq.s32.totalorder %s25, 0
      %p185 = por %p183, %p184
      %p186 = scmp.ne.s32.totalorder %s178, %s180
      %p187 = scmp.eq.s32.totalorder %s30, 11
      %p188 = por %p186, %p187
      %p189 = scmp.ne.s32.totalorder %s180, %s181
      %p190 = scmp.eq.s32.totalorder %s30, 0
      %p191 = por %p189, %p190
      %p192 = scmp.ne.s32.totalorder %s180, %s181
      %p193 = scmp.eq.s32.totalorder %s31, 11
      %p194 = por %p192, %p193
      %p196 = scmp.ne.s32.totalorder %s181, %s195
      %p197 = scmp.eq.s32.totalorder %s31, 0
      %p198 = por %p196, %p197
      %s200 = sadd.s32 %s199, 1
      %p203 = scmp.eq.s32.totalorder %s25, 11
      %p204 = scmp.ne.s32.totalorder %s199, %s201
      %p205 = scmp.eq.s32.totalorder %s25, 0
      %p206 = por %p204, %p205
      %p207 = scmp.ne.s32.totalorder %s199, %s201
      %p208 = scmp.eq.s32.totalorder %s30, 11
      %p209 = por %p207, %p208
      %p210 = scmp.ne.s32.totalorder %s201, %s202
      %p211 = scmp.eq.s32.totalorder %s30, 0
      %p212 = por %p210, %p211
      %p213 = scmp.ne.s32.totalorder %s201, %s202
      %p214 = scmp.eq.s32.totalorder %s31, 11
      %p215 = por %p213, %p214
      %p217 = scmp.ne.s32.totalorder %s202, %s216
      %p218 = scmp.eq.s32.totalorder %s31, 0
      %p219 = por %p217, %p218
      %s221 = sadd.s32 %s220, 1
      %p224 = scmp.eq.s32.totalorder %s25, 11
      %p225 = scmp.ne.s32.totalorder %s220, %s222
      %p226 = scmp.eq.s32.totalorder %s25, 0
      %p227 = por %p225, %p226
      %p228 = scmp.ne.s32.totalorder %s220, %s222
      %p229 = scmp.eq.s32.totalorder %s30, 11
      %p230 = por %p228, %p229
      %p231 = scmp.ne.s32.totalorder %s222, %s223
      %p232 = scmp.eq.s32.totalorder %s30, 0
      %p233 = por %p231, %p232
      %p234 = scmp.ne.s32.totalorder %s222, %s223
      %p235 = scmp.eq.s32.totalorder %s31, 11
      %p236 = por %p234, %p235
      %p238 = scmp.ne.s32.totalorder %s223, %s237
      %p239 = scmp.eq.s32.totalorder %s31, 0
      %p240 = por %p238, %p239
      %s241 = ssub.s32 %s32, %s44
      %p242 = scmp.eq.s32.totalorder %s241, 0
      %s244 = sadd.s32 %s243, 1
      %s245 = scalar_select %p242, %s243, %s244
      %p248 = pneg %p242
      %p249 = scmp.eq.s32.totalorder %s25, 11
      %p250 = por %p248, %p249
      %p251 = scmp.ne.s32.totalorder %s243, %s246
      %p252 = scmp.eq.s32.totalorder %s25, 0
      %p253 = por %p251, %p252
      %p254 = scmp.ne.s32.totalorder %s243, %s246
      %p255 = scmp.eq.s32.totalorder %s30, 11
      %p256 = por %p254, %p255
      %p257 = scmp.ne.s32.totalorder %s246, %s247
      %p258 = scmp.eq.s32.totalorder %s30, 0
      %p259 = por %p257, %p258
      %p260 = scmp.ne.s32.totalorder %s246, %s247
      %p261 = scmp.eq.s32.totalorder %s31, 11
      %p262 = por %p260, %p261
      %p264 = scmp.ne.s32.totalorder %s247, %s263
      %p265 = scmp.eq.s32.totalorder %s31, 0
      %p266 = por %p264, %p265
      %p267 = scmp.le.s32.totalorder 1, %s25
      %p268 = scmp.lt.s32.totalorder %s25, 13
      %p269 = pnand %p267, %p268
      %p270 = pneg %p269
      // Predicated region
      $region9: #{tpu_custom_call.1} parent=5 // pred_check
        _
      $region10: #{tpu_custom_call.1} parent=5 // pred_check_branch
        %272 = sbr.rel (%p269) target = $region12
      $region11: #{tpu_custom_call.1} parent=5 // pred_region
        %s273 = ssub.s32 %s25, 1
        // Predicated region
        $region13: #{tpu_custom_call.1} parent=11 // pred_check
          %p274 = pneg %p86
        $region14: #{tpu_custom_call.1} parent=11 // pred_check_branch
          %276 = sbr.rel (%p274) target = $region16
        $region15: #{tpu_custom_call.1} parent=11 // pred_region
          %s278 = ssub.s32 768, 768
          %279 = vsyncadd [#allocation7], %s278
          %s280 = sshll.u32 [#allocation6], 4
          %s281 = int_to_ptr.vmem [resolvable:$true] %s280
          %286 = dma.hbm_to_vmem [thread:$0]  %s1, 768, %s281, [#allocation7], 64, 64, 4
        $region16: #{tpu_custom_call.1} parent=11 // pred_fallthru
          _
        // Predicated region
        $region17: #{tpu_custom_call.1} parent=11 // pred_check
          %p287 = pneg %p107
        $region18: #{tpu_custom_call.1} parent=11 // pred_check_branch
          %289 = sbr.rel (%p287) target = $region20
        $region19: #{tpu_custom_call.1} parent=11 // pred_region
          %s291 = ssub.s32 48, 48
          %292 = vsyncadd [#allocation7], %s291
          %s293 = sshll.u32 [#allocation8], 4
          %s294 = int_to_ptr.vmem [resolvable:$true] %s293
          %299 = dma.hbm_to_vmem [thread:$0]  %s2, 48, %s294, [#allocation7], 16, 16, 1
        $region20: #{tpu_custom_call.1} parent=11 // pred_fallthru
          _
        // Predicated region
        $region21: #{tpu_custom_call.1} parent=11 // pred_check
          %p300 = pneg %p128
        $region22: #{tpu_custom_call.1} parent=11 // pred_check_branch
          %302 = sbr.rel (%p300) target = $region24
        $region23: #{tpu_custom_call.1} parent=11 // pred_region
          %s304 = ssub.s32 3072, 3072
          %305 = vsyncadd [#allocation10], %s304
          %s306 = sshll.u32 [#allocation9], 4
          %s307 = int_to_ptr.vmem [resolvable:$true] %s306
          %312 = dma.hbm_to_vmem [thread:$0]  %s3, 3072, %s307, [#allocation10], 64, 64, 4
        $region24: #{tpu_custom_call.1} parent=11 // pred_fallthru
          _
        // Predicated region
        $region25: #{tpu_custom_call.1} parent=11 // pred_check
          %p313 = pneg %p149
        $region26: #{tpu_custom_call.1} parent=11 // pred_check_branch
          %315 = sbr.rel (%p313) target = $region28
        $region27: #{tpu_custom_call.1} parent=11 // pred_region
          %s317 = ssub.s32 48, 48
          %318 = vsyncadd [#allocation10], %s317
          %s319 = sshll.u32 [#allocation11], 4
          %s320 = int_to_ptr.vmem [resolvable:$true] %s319
          %325 = dma.hbm_to_vmem [thread:$0]  %s4, 48, %s320, [#allocation10], 16, 16, 1
        $region28: #{tpu_custom_call.1} parent=11 // pred_fallthru
          _
        // Predicated region
        $region29: #{tpu_custom_call.1} parent=11 // pred_check
          %p326 = pneg %p170
        $region30: #{tpu_custom_call.1} parent=11 // pred_check_branch
          %328 = sbr.rel (%p326) target = $region32
        $region31: #{tpu_custom_call.1} parent=11 // pred_region
          %s330 = ssub.s32 3072, 3072
          %331 = vsyncadd [#allocation13], %s330
          %s332 = sshll.u32 [#allocation12], 4
          %s333 = int_to_ptr.vmem [resolvable:$true] %s332
          %338 = dma.hbm_to_vmem [thread:$0]  %s5, 3072, %s333, [#allocation13], 64, 64, 4
        $region32: #{tpu_custom_call.1} parent=11 // pred_fallthru
          _
        // Predicated region
        $region33: #{tpu_custom_call.1} parent=11 // pred_check
          %p339 = pneg %p191
        $region34: #{tpu_custom_call.1} parent=11 // pred_check_branch
          %341 = sbr.rel (%p339) target = $region36
        $region35: #{tpu_custom_call.1} parent=11 // pred_region
          %s343 = ssub.s32 16, 16
          %344 = vsyncadd [#allocation13], %s343
          %s346 = sshll.u32 [#allocation14], 4
          %s347 = int_to_ptr.vmem [resolvable:$true] %s346
          %349 = dma.hbm_to_vmem [thread:$0]  %s6, 16, %s347, [#allocation13]
        $region36: #{tpu_custom_call.1} parent=11 // pred_fallthru
          _
        // Predicated region
        $region37: #{tpu_custom_call.1} parent=11 // pred_check
          %p350 = pneg %p212
        $region38: #{tpu_custom_call.1} parent=11 // pred_check_branch
          %352 = sbr.rel (%p350) target = $region40
        $region39: #{tpu_custom_call.1} parent=11 // pred_region
          %s354 = ssub.s32 1024, 1024
          %355 = vsyncadd [#allocation16], %s354
          %s356 = sshll.u32 [#allocation15], 4
          %s357 = int_to_ptr.vmem [resolvable:$true] %s356
          %362 = dma.hbm_to_vmem [thread:$0]  %s7, 1024, %s357, [#allocation16], 64, 64, 4
        $region40: #{tpu_custom_call.1} parent=11 // pred_fallthru
          _
        // Predicated region
        $region41: #{tpu_custom_call.1} parent=11 // pred_check
          %p363 = pneg %p233
        $region42: #{tpu_custom_call.1} parent=11 // pred_check_branch
          %365 = sbr.rel (%p363) target = $region44
        $region43: #{tpu_custom_call.1} parent=11 // pred_region
          %s367 = ssub.s32 16, 16
          %368 = vsyncadd [#allocation16], %s367
          %s370 = sshll.u32 [#allocation17], 4
          %s371 = int_to_ptr.vmem [resolvable:$true] %s370
          %373 = dma.hbm_to_vmem [thread:$0]  %s8, 16, %s371, [#allocation16]
        $region44: #{tpu_custom_call.1} parent=11 // pred_fallthru
          _
      $region12: #{tpu_custom_call.1} parent=5 // pred_fallthru
        _
      %p374 = scmp.lt.s32.totalorder %s25, 12
      // Predicated region
      $region45: #{tpu_custom_call.1} parent=5 // pred_check
        %p375 = pneg %p374
      $region46: #{tpu_custom_call.1} parent=5 // pred_check_branch
        %377 = sbr.rel (%p375) target = $region48
      $region47: #{tpu_custom_call.1} parent=5 // pred_region
        // Predicated region
        $region49: #{tpu_custom_call.1} parent=47 // pred_check
          %p378 = pneg %p59
        $region50: #{tpu_custom_call.1} parent=47 // pred_check_branch
          %380 = sbr.rel (%p378) target = $region52
        $region51: #{tpu_custom_call.1} parent=47 // pred_region
          %s381 = sand.u32 %s49, 1
          %s382 = scalar_lea.sflag [#allocation4], %s381
          %s383 = sand.u32 %s49, 1
          %s384 = smul.addr %s383, 32
          %s385 = scalar_lea.vmem [#allocation3], %s384
          %s386 = smul.u32 8, %s32
          %s388 = ssub.s32 512, 512
          %389 = vsyncadd %s382, %s388
          %s390 = smul.addr %s33, 32
          %s391 = sadd.s32 %s386, %s390
          %s392 = smul.addr %s391, 64
          %s393 = scalar_lea.hbm %s0, %s392
          %s394 = sshll.u32 %s385, 4
          %s395 = int_to_ptr.vmem [resolvable:$true] %s394
          %400 = dma.hbm_to_vmem [thread:$0]  %s393, 512, %s395, %s382, 64, 64, 4
        $region52: #{tpu_custom_call.1} parent=47 // pred_fallthru
          _
      $region48: #{tpu_custom_call.1} parent=5 // pred_fallthru
        _
      %p401 = scmp.le.s32.totalorder 1, %s25
      %p402 = scmp.lt.s32.totalorder %s25, 13
      %p403 = pnand %p401, %p402
      %p404 = pneg %p403
      // Predicated region
      $region53: #{tpu_custom_call.1} parent=5 // pred_check
        _
      $region54: #{tpu_custom_call.1} parent=5 // pred_check_branch
        %406 = sbr.rel (%p403) target = $region56
      $region55: #{tpu_custom_call.1} parent=5 // pred_region
        %s407 = ssub.s32 %s25, 1
        %s408 = sand.u32 %s52, 1
        %s409 = scalar_lea.sflag [#allocation4], %s408
        %s410 = sand.u32 %s52, 1
        %s411 = smul.addr %s410, 32
        %s412 = scalar_lea.vmem [#allocation3], %s411
        // Predicated region
        $region57: #{tpu_custom_call.1} parent=55 // pred_check
          %p413 = pneg %p65
        $region58: #{tpu_custom_call.1} parent=55 // pred_check_branch
          %415 = sbr.rel (%p413) target = $region60
        $region59: #{tpu_custom_call.1} parent=55 // pred_region
          %416 = dma.done %s409, 512
        $region60: #{tpu_custom_call.1} parent=55 // pred_fallthru
          _
        // Predicated region
        $region61: #{tpu_custom_call.1} parent=55 // pred_check
          %p417 = pneg %p86
        $region62: #{tpu_custom_call.1} parent=55 // pred_check_branch
          %419 = sbr.rel (%p417) target = $region64
        $region63: #{tpu_custom_call.1} parent=55 // pred_region
          %420 = dma.done [#allocation7], 768
        $region64: #{tpu_custom_call.1} parent=55 // pred_fallthru
          _
        // Predicated region
        $region65: #{tpu_custom_call.1} parent=55 // pred_check
          %p421 = pneg %p107
        $region66: #{tpu_custom_call.1} parent=55 // pred_check_branch
          %423 = sbr.rel (%p421) target = $region68
        $region67: #{tpu_custom_call.1} parent=55 // pred_region
          %424 = dma.done [#allocation7], 48
        $region68: #{tpu_custom_call.1} parent=55 // pred_fallthru
          _
        // Predicated region
        $region69: #{tpu_custom_call.1} parent=55 // pred_check
          %p425 = pneg %p128
        $region70: #{tpu_custom_call.1} parent=55 // pred_check_branch
          %427 = sbr.rel (%p425) target = $region72
        $region71: #{tpu_custom_call.1} parent=55 // pred_region
          %428 = dma.done [#allocation10], 3072
        $region72: #{tpu_custom_call.1} parent=55 // pred_fallthru
          _
        // Predicated region
        $region73: #{tpu_custom_call.1} parent=55 // pred_check
          %p429 = pneg %p149
        $region74: #{tpu_custom_call.1} parent=55 // pred_check_branch
          %431 = sbr.rel (%p429) target = $region76
        $region75: #{tpu_custom_call.1} parent=55 // pred_region
          %432 = dma.done [#allocation10], 48
        $region76: #{tpu_custom_call.1} parent=55 // pred_fallthru
          _
        // Predicated region
        $region77: #{tpu_custom_call.1} parent=55 // pred_check
          %p433 = pneg %p170
        $region78: #{tpu_custom_call.1} parent=55 // pred_check_branch
          %435 = sbr.rel (%p433) target = $region80
        $region79: #{tpu_custom_call.1} parent=55 // pred_region
          %436 = dma.done [#allocation13], 3072
        $region80: #{tpu_custom_call.1} parent=55 // pred_fallthru
          _
        // Predicated region
        $region81: #{tpu_custom_call.1} parent=55 // pred_check
          %p437 = pneg %p191
        $region82: #{tpu_custom_call.1} parent=55 // pred_check_branch
          %439 = sbr.rel (%p437) target = $region84
        $region83: #{tpu_custom_call.1} parent=55 // pred_region
          %440 = dma.done [#allocation13], 16
        $region84: #{tpu_custom_call.1} parent=55 // pred_fallthru
          _
        // Predicated region
        $region85: #{tpu_custom_call.1} parent=55 // pred_check
          %p441 = pneg %p212
        $region86: #{tpu_custom_call.1} parent=55 // pred_check_branch
          %443 = sbr.rel (%p441) target = $region88
        $region87: #{tpu_custom_call.1} parent=55 // pred_region
          %444 = dma.done [#allocation16], 1024
        $region88: #{tpu_custom_call.1} parent=55 // pred_fallthru
          _
        // Predicated region
        $region89: #{tpu_custom_call.1} parent=55 // pred_check
          %p445 = pneg %p233
        $region90: #{tpu_custom_call.1} parent=55 // pred_check_branch
          %447 = sbr.rel (%p445) target = $region92
        $region91: #{tpu_custom_call.1} parent=55 // pred_region
          %448 = dma.done [#allocation16], 16
        $region92: #{tpu_custom_call.1} parent=55 // pred_fallthru
          _
        %s449 = sand.u32 %s52, 1
        %s450 = scalar_lea.sflag [#allocation4], %s449
        %s451 = sand.u32 %s52, 1
        %s452 = smul.addr %s451, 32
        %s453 = scalar_lea.vmem [#allocation3], %s452
        %p454 = pneg %p65
        %p455 = pneg %p62
        %p456 = pneg %p86
        %p457 = pneg %p83
        %p458 = pneg %p107
        %p459 = pneg %p104
        %p460 = pneg %p128
        %p461 = pneg %p125
        %p462 = pneg %p149
        %p463 = pneg %p146
        %p464 = pneg %p170
        %p465 = pneg %p167
        %p466 = pneg %p191
        %p467 = pneg %p188
        %p468 = pneg %p212
        %p469 = pneg %p209
        %p470 = pneg %p233
        %p471 = pneg %p230
        %p472 = pneg %p259
        %p473 = pneg %p256
        %s474 = sand.u32 %s246, 1
        %s475 = scalar_lea.sflag [#allocation5], %s474
        %s476 = sand.u32 %s246, 1
        %s477 = smul.addr %s476, 64
        %s478 = scalar_lea.vmem [#allocation18], %s477
        %s479 = smul.u32 8, %s34
        %s480 = smul.u32 8, %s34
        %v482 = vld [vmem:[%s412] sm:$0xf]
        %v483 = vld [vmem:[%s412 + $0x4] sm:$0xf]
        %v484 = vld [vmem:[%s412 + $0x8] sm:$0xf]
        %v485 = vld [vmem:[%s412 + $0xc] sm:$0xf]
        %v486 = vld [vmem:[%s412 + $0x10] sm:$0xf]
        %v487 = vld [vmem:[%s412 + $0x14] sm:$0xf]
        %v488 = vld [vmem:[%s412 + $0x18] sm:$0xf]
        %v489 = vld [vmem:[%s412 + $0x1c] sm:$0xf]
        %s490 = smul.u32 %s35, 4
        %s491 = smul.addr %s490, 4
        %s492 = scalar_lea.vmem [#allocation6], %s491
        %v493 = vld [vmem:[%s492] sm:$0xf]
        %v494 = vld [vmem:[%s492 + $0x4] sm:$0xf]
        %v495 = vld [vmem:[%s492 + $0x8] sm:$0xf]
        %v496 = vld [vmem:[%s492 + $0xc] sm:$0xf]
        %s497 = scalar_lea.vmem [#allocation8], %s35
        %v498 = vld [vmem:[%s497] sm:$0x1]
        %s499 = smul.u32 %s35, 16
        %s500 = smul.addr %s499, 4
        %s501 = scalar_lea.vmem [#allocation9], %s500
        %v502 = vld [vmem:[%s501] sm:$0xf]
        %v503 = vld [vmem:[%s501 + $0x4] sm:$0xf]
        %v504 = vld [vmem:[%s501 + $0x8] sm:$0xf]
        %v505 = vld [vmem:[%s501 + $0xc] sm:$0xf]
        %v506 = vld [vmem:[%s501 + $0x10] sm:$0xf]
        %v507 = vld [vmem:[%s501 + $0x14] sm:$0xf]
        %v508 = vld [vmem:[%s501 + $0x18] sm:$0xf]
        %v509 = vld [vmem:[%s501 + $0x1c] sm:$0xf]
        %v510 = vld [vmem:[%s501 + $0x20] sm:$0xf]
        %v511 = vld [vmem:[%s501 + $0x24] sm:$0xf]
        %v512 = vld [vmem:[%s501 + $0x28] sm:$0xf]
        %v513 = vld [vmem:[%s501 + $0x2c] sm:$0xf]
        %v514 = vld [vmem:[%s501 + $0x30] sm:$0xf]
        %v515 = vld [vmem:[%s501 + $0x34] sm:$0xf]
        %v516 = vld [vmem:[%s501 + $0x38] sm:$0xf]
        %v517 = vld [vmem:[%s501 + $0x3c] sm:$0xf]
        %s518 = scalar_lea.vmem [#allocation11], %s35
        %v519 = vld [vmem:[%s518] sm:$0x1]
        %s520 = smul.addr %s499, 4
        %s521 = scalar_lea.vmem [#allocation12], %s520
        %v522 = vld [vmem:[%s521] sm:$0xf]
        %v523 = vld [vmem:[%s521 + $0x4] sm:$0xf]
        %v524 = vld [vmem:[%s521 + $0x8] sm:$0xf]
        %v525 = vld [vmem:[%s521 + $0xc] sm:$0xf]
        %v526 = vld [vmem:[%s521 + $0x10] sm:$0xf]
        %v527 = vld [vmem:[%s521 + $0x14] sm:$0xf]
        %v528 = vld [vmem:[%s521 + $0x18] sm:$0xf]
        %v529 = vld [vmem:[%s521 + $0x1c] sm:$0xf]
        %v530 = vld [vmem:[%s521 + $0x20] sm:$0xf]
        %v531 = vld [vmem:[%s521 + $0x24] sm:$0xf]
        %v532 = vld [vmem:[%s521 + $0x28] sm:$0xf]
        %v533 = vld [vmem:[%s521 + $0x2c] sm:$0xf]
        %v534 = vld [vmem:[%s521 + $0x30] sm:$0xf]
        %v535 = vld [vmem:[%s521 + $0x34] sm:$0xf]
        %v536 = vld [vmem:[%s521 + $0x38] sm:$0xf]
        %v537 = vld [vmem:[%s521 + $0x3c] sm:$0xf]
        %v539 = vlaneseq
        %v540 = vshrl.u32 %v539, 7
        %v541 = vsub.s32 0, %v540
        %v542 = vrot.slane %v498, %v541
        %v552 = vunpack.c.l.b16 %v482
        %v553 = vunpack.c.l.b16 %v483
        %v554 = vunpack.c.l.b16 %v484
        %v555 = vunpack.c.l.b16 %v485
        %v556 = vunpack.c.l.b16 %v486
        %v557 = vunpack.c.l.b16 %v487
        %v558 = vunpack.c.l.b16 %v488
        %v559 = vunpack.c.l.b16 %v489
        %v560 = vpack.c.b16 %v553, %v552
        %v561 = vpack.c.b16 %v555, %v554
        %v562 = vpack.c.b16 %v557, %v556
        %v563 = vpack.c.b16 %v559, %v558
        %v568 = vunpack.c.l.b16 %v493
        %v569 = vunpack.c.l.b16 %v494
        %v570 = vunpack.c.l.b16 %v495
        %v571 = vunpack.c.l.b16 %v496
        %v572 = vpack.c.b16 %v569, %v568
        %v573 = vpack.c.b16 %v571, %v570
        %vm576 = vcmask 261120
        %v578 = vsel %vm576, %v560, 0
        %v581 = vsel %vm576, %v561, 0
        %v584 = vsel %vm576, %v562, 0
        %v587 = vsel %vm576, %v563, 0
        %589 = vmatprep.subr.bf16.mxu0 0
        %590 = vmatpush1.bf16.msra.mxu0 %v572
        %591 = vmatprep.subr.bf16.mxu0 0
        %592 = vmatpush1.bf16.msra.mxu0 %v573
        %593 = vmatprep.subr.bf16.mxu0 0
        %594 = vmatpush1.bf16.msra.mxu0 0
        %595 = vmatprep.subr.bf16.mxu0 0
        %596 = vmatpush1.bf16.msra.mxu0 0
        %597 = vmatprep.subr.bf16.mxu0 0
        %598 = vmatpush1.bf16.msra.mxu0 0
        %599 = vmatprep.subr.bf16.mxu0 0
        %600 = vmatpush1.bf16.msra.mxu0 0
        %601 = vmatprep.subr.bf16.mxu0 0
        %602 = vmatpush1.bf16.msra.mxu0 0
        %603 = vmatprep.subr.bf16.mxu0 0
        %604 = vmatpush1.bf16.msra.mxu0 0
        %605 = vmatprep.subr.bf16.mxu0 0
        %606 = vmatpush1.bf16.msra.mxu0 0
        %607 = vmatprep.subr.bf16.mxu0 0
        %608 = vmatpush1.bf16.msra.mxu0 0
        %609 = vmatprep.subr.bf16.mxu0 0
        %610 = vmatpush1.bf16.msra.mxu0 0
        %611 = vmatprep.subr.bf16.mxu0 0
        %612 = vmatpush1.bf16.msra.mxu0 0
        %613 = vmatprep.subr.bf16.mxu0 0
        %614 = vmatpush1.bf16.msra.mxu0 0
        %615 = vmatprep.subr.bf16.mxu0 0
        %616 = vmatpush1.bf16.msra.mxu0 0
        %617 = vmatprep.subr.bf16.mxu0 0
        %618 = vmatpush1.bf16.msra.mxu0 0
        %619 = vmatprep.subr.bf16.mxu0 0
        %620 = vmatpush1.bf16.msra.mxu0 0
        %621 = vmatprep.mubr.bf16.mxu0 0
        %622 = vmatmul.mubr.bf16.gmra.mrb[0].mxu0 %v578
        %v623 = vpop.f32.mrb[0].mxu0
        %v624 = vadd.f32 %v542, %v623
        %v625 = vpop.f32.mrb[0].mxu0
        %v626 = vpop.f32.mrb[0].mxu0
        %v627 = vadd.f32 %v542, %v626
        %v628 = vpop.f32.mrb[0].mxu0
        %629 = vmatprep.mubr.bf16.mxu0 0
        %630 = vmatmul.mubr.bf16.gmra.mrb[0].mxu0 %v581
        %v631 = vpop.f32.mrb[0].mxu0
        %v632 = vadd.f32 %v542, %v631
        %v633 = vpop.f32.mrb[0].mxu0
        %v634 = vpop.f32.mrb[0].mxu0
        %v635 = vadd.f32 %v542, %v634
        %v636 = vpop.f32.mrb[0].mxu0
        %637 = vmatprep.mubr.bf16.mxu0 0
        %638 = vmatmul.mubr.bf16.gmra.mrb[0].mxu0 %v584
        %v639 = vpop.f32.mrb[0].mxu0
        %v640 = vadd.f32 %v542, %v639
        %v641 = vpop.f32.mrb[0].mxu0
        %v642 = vpop.f32.mrb[0].mxu0
        %v643 = vadd.f32 %v542, %v642
        %v644 = vpop.f32.mrb[0].mxu0
        %645 = vmatprep.mubr.bf16.mxu0 0
        %646 = vmatmul.mubr.bf16.gmra.mrb[0].mxu0 %v587
        %v647 = vpop.f32.mrb[0].mxu0
        %v648 = vadd.f32 %v542, %v647
        %v649 = vpop.f32.mrb[0].mxu0
        %v650 = vpop.f32.mrb[0].mxu0
        %v651 = vadd.f32 %v542, %v650
        %v652 = vpop.f32.mrb[0].mxu0
        %653 = vdwg.mxu0
        %v654 = vmax.f32 %v624, 0.0
        %v655 = vmax.f32 %v627, 0.0
        %v656 = vmax.f32 %v632, 0.0
        %v657 = vmax.f32 %v635, 0.0
        %v658 = vmax.f32 %v640, 0.0
        %v659 = vmax.f32 %v643, 0.0
        %v660 = vmax.f32 %v648, 0.0
        %v661 = vmax.f32 %v651, 0.0
        %v662 = vpack.c.bf16 %v655, %v654
        %v663 = vpack.c.bf16 %v657, %v656
        %v664 = vpack.c.bf16 %v659, %v658
        %v665 = vpack.c.bf16 %v661, %v660
        %v667 = vlaneseq
        %v668 = vshrl.u32 %v667, 7
        %v669 = vsub.s32 0, %v668
        %v670 = vrot.slane %v519, %v669
        %v688 = vunpack.c.l.b16 %v502
        %v689 = vunpack.c.l.b16 %v503
        %v690 = vunpack.c.l.b16 %v504
        %v691 = vunpack.c.l.b16 %v505
        %v692 = vunpack.c.l.b16 %v506
        %v693 = vunpack.c.l.b16 %v507
        %v694 = vunpack.c.l.b16 %v508
        %v695 = vunpack.c.l.b16 %v509
        %v696 = vunpack.c.l.b16 %v510
        %v697 = vunpack.c.l.b16 %v511
        %v698 = vunpack.c.l.b16 %v512
        %v699 = vunpack.c.l.b16 %v513
        %v700 = vunpack.c.l.b16 %v514
        %v701 = vunpack.c.l.b16 %v515
        %v702 = vunpack.c.l.b16 %v516
        %v703 = vunpack.c.l.b16 %v517
        %v704 = vpack.c.b16 %v689, %v688
        %v705 = vpack.c.b16 %v691, %v690
        %v706 = vpack.c.b16 %v693, %v692
        %v707 = vpack.c.b16 %v695, %v694
        %v708 = vpack.c.b16 %v697, %v696
        %v709 = vpack.c.b16 %v699, %v698
        %v710 = vpack.c.b16 %v701, %v700
        %v711 = vpack.c.b16 %v703, %v702
        %720 = vmatprep.subr.bf16.mxu0 0
        %721 = vmatpush1.bf16.msra.mxu0 %v704
        %722 = vmatprep.subr.bf16.mxu0 0
        %723 = vmatpush1.bf16.msra.mxu0 %v705
        %724 = vmatprep.subr.bf16.mxu0 0
        %725 = vmatpush1.bf16.msra.mxu0 %v706
        %726 = vmatprep.subr.bf16.mxu0 0
        %727 = vmatpush1.bf16.msra.mxu0 %v707
        %728 = vmatprep.subr.bf16.mxu0 0
        %729 = vmatpush1.bf16.msra.mxu0 %v708
        %730 = vmatprep.subr.bf16.mxu0 0
        %731 = vmatpush1.bf16.msra.mxu0 %v709
        %732 = vmatprep.subr.bf16.mxu0 0
        %733 = vmatpush1.bf16.msra.mxu0 %v710
        %734 = vmatprep.subr.bf16.mxu0 0
        %735 = vmatpush1.bf16.msra.mxu0 %v711
        %736 = vmatprep.subr.bf16.mxu0 0
        %737 = vmatpush1.bf16.msra.mxu0 0
        %738 = vmatprep.subr.bf16.mxu0 0
        %739 = vmatpush1.bf16.msra.mxu0 0
        %740 = vmatprep.subr.bf16.mxu0 0
        %741 = vmatpush1.bf16.msra.mxu0 0
        %742 = vmatprep.subr.bf16.mxu0 0
        %743 = vmatpush1.bf16.msra.mxu0 0
        %744 = vmatprep.subr.bf16.mxu0 0
        %745 = vmatpush1.bf16.msra.mxu0 0
        %746 = vmatprep.subr.bf16.mxu0 0
        %747 = vmatpush1.bf16.msra.mxu0 0
        %748 = vmatprep.subr.bf16.mxu0 0
        %749 = vmatpush1.bf16.msra.mxu0 0
        %750 = vmatprep.subr.bf16.mxu0 0
        %751 = vmatpush1.bf16.msra.mxu0 0
        %752 = vmatprep.mubr.bf16.mxu0 0
        %753 = vmatmul.mubr.bf16.gmra.mrb[0].mxu0 %v662
        %v754 = vpop.f32.mrb[0].mxu0
        %v755 = vadd.f32 %v670, %v754
        %v756 = vpop.f32.mrb[0].mxu0
        %v757 = vpop.f32.mrb[0].mxu0
        %v758 = vadd.f32 %v670, %v757
        %v759 = vpop.f32.mrb[0].mxu0
        %760 = vmatprep.mubr.bf16.mxu0 0
        %761 = vmatmul.mubr.bf16.gmra.mrb[0].mxu0 %v663
        %v762 = vpop.f32.mrb[0].mxu0
        %v763 = vadd.f32 %v670, %v762
        %v764 = vpop.f32.mrb[0].mxu0
        %v765 = vpop.f32.mrb[0].mxu0
        %v766 = vadd.f32 %v670, %v765
        %v767 = vpop.f32.mrb[0].mxu0
        %768 = vmatprep.mubr.bf16.mxu0 0
        %769 = vmatmul.mubr.bf16.gmra.mrb[0].mxu0 %v664
        %v770 = vpop.f32.mrb[0].mxu0
        %v771 = vadd.f32 %v670, %v770
        %v772 = vpop.f32.mrb[0].mxu0
        %v773 = vpop.f32.mrb[0].mxu0
        %v774 = vadd.f32 %v670, %v773
        %v775 = vpop.f32.mrb[0].mxu0
        %776 = vmatprep.mubr.bf16.mxu0 0
        %777 = vmatmul.mubr.bf16.gmra.mrb[0].mxu0 %v665
        %v778 = vpop.f32.mrb[0].mxu0
        %v779 = vadd.f32 %v670, %v778
        %v780 = vpop.f32.mrb[0].mxu0
        %v781 = vpop.f32.mrb[0].mxu0
        %v782 = vadd.f32 %v670, %v781
        %v783 = vpop.f32.mrb[0].mxu0
        %784 = vdwg.mxu0
        %v785 = vmax.f32 %v755, 0.0
        %v786 = vmax.f32 %v758, 0.0
        %v787 = vmax.f32 %v763, 0.0
        %v788 = vmax.f32 %v766, 0.0
        %v789 = vmax.f32 %v771, 0.0
        %v790 = vmax.f32 %v774, 0.0
        %v791 = vmax.f32 %v779, 0.0
        %v792 = vmax.f32 %v782, 0.0
        %v793 = vpack.c.bf16 %v786, %v785
        %v794 = vpack.c.bf16 %v788, %v787
        %v795 = vpack.c.bf16 %v790, %v789
        %v796 = vpack.c.bf16 %v792, %v791
        %v813 = vunpack.c.l.b16 %v522
        %v814 = vunpack.c.l.b16 %v523
        %v815 = vunpack.c.l.b16 %v524
        %v816 = vunpack.c.l.b16 %v525
        %v817 = vunpack.c.l.b16 %v526
        %v818 = vunpack.c.l.b16 %v527
        %v819 = vunpack.c.l.b16 %v528
        %v820 = vunpack.c.l.b16 %v529
        %v821 = vunpack.c.l.b16 %v530
        %v822 = vunpack.c.l.b16 %v531
        %v823 = vunpack.c.l.b16 %v532
        %v824 = vunpack.c.l.b16 %v533
        %v825 = vunpack.c.l.b16 %v534
        %v826 = vunpack.c.l.b16 %v535
        %v827 = vunpack.c.l.b16 %v536
        %v828 = vunpack.c.l.b16 %v537
        %v829 = vpack.c.b16 %v814, %v813
        %v830 = vpack.c.b16 %v816, %v815
        %v831 = vpack.c.b16 %v818, %v817
        %v832 = vpack.c.b16 %v820, %v819
        %v833 = vpack.c.b16 %v822, %v821
        %v834 = vpack.c.b16 %v824, %v823
        %v835 = vpack.c.b16 %v826, %v825
        %v836 = vpack.c.b16 %v828, %v827
        %845 = vmatprep.subr.bf16.mxu0 0
        %846 = vmatpush1.bf16.msra.mxu0 %v829
        %847 = vmatprep.subr.bf16.mxu0 0
        %848 = vmatpush1.bf16.msra.mxu0 %v830
        %849 = vmatprep.subr.bf16.mxu0 0
        %850 = vmatpush1.bf16.msra.mxu0 %v831
        %851 = vmatprep.subr.bf16.mxu0 0
        %852 = vmatpush1.bf16.msra.mxu0 %v832
        %853 = vmatprep.subr.bf16.mxu0 0
        %854 = vmatpush1.bf16.msra.mxu0 %v833
        %855 = vmatprep.subr.bf16.mxu0 0
        %856 = vmatpush1.bf16.msra.mxu0 %v834
        %857 = vmatprep.subr.bf16.mxu0 0
        %858 = vmatpush1.bf16.msra.mxu0 %v835
        %859 = vmatprep.subr.bf16.mxu0 0
        %860 = vmatpush1.bf16.msra.mxu0 %v836
        %861 = vmatprep.subr.bf16.mxu0 0
        %862 = vmatpush1.bf16.msra.mxu0 0
        %863 = vmatprep.subr.bf16.mxu0 0
        %864 = vmatpush1.bf16.msra.mxu0 0
        %865 = vmatprep.subr.bf16.mxu0 0
        %866 = vmatpush1.bf16.msra.mxu0 0
        %867 = vmatprep.subr.bf16.mxu0 0
        %868 = vmatpush1.bf16.msra.mxu0 0
        %869 = vmatprep.subr.bf16.mxu0 0
        %870 = vmatpush1.bf16.msra.mxu0 0
        %871 = vmatprep.subr.bf16.mxu0 0
        %872 = vmatpush1.bf16.msra.mxu0 0
        %873 = vmatprep.subr.bf16.mxu0 0
        %874 = vmatpush1.bf16.msra.mxu0 0
        %875 = vmatprep.subr.bf16.mxu0 0
        %876 = vmatpush1.bf16.msra.mxu0 0
        %877 = vmatprep.mubr.bf16.mxu0 0
        %878 = vmatmul.mubr.bf16.gmra.mrb[0].mxu0 %v793
        %v879 = vpop.f32.mrb[0].mxu0
        %v880 = vadd.f32 0.0, %v879
        %v881 = vpop.f32.mrb[0].mxu0
        %v882 = vpop.f32.mrb[0].mxu0
        %v883 = vadd.f32 0.0, %v882
        %v884 = vpop.f32.mrb[0].mxu0
        %885 = vmatprep.mubr.bf16.mxu0 0
        %886 = vmatmul.mubr.bf16.gmra.mrb[0].mxu0 %v794
        %v887 = vpop.f32.mrb[0].mxu0
        %v888 = vadd.f32 0.0, %v887
        %v889 = vpop.f32.mrb[0].mxu0
        %v890 = vpop.f32.mrb[0].mxu0
        %v891 = vadd.f32 0.0, %v890
        %v892 = vpop.f32.mrb[0].mxu0
        %893 = vmatprep.mubr.bf16.mxu0 0
        %894 = vmatmul.mubr.bf16.gmra.mrb[0].mxu0 %v795
        %v895 = vpop.f32.mrb[0].mxu0
        %v896 = vadd.f32 0.0, %v895
        %v897 = vpop.f32.mrb[0].mxu0
        %v898 = vpop.f32.mrb[0].mxu0
        %v899 = vadd.f32 0.0, %v898
        %v900 = vpop.f32.mrb[0].mxu0
        %901 = vmatprep.mubr.bf16.mxu0 0
        %902 = vmatmul.mubr.bf16.gmra.mrb[0].mxu0 %v796
        %v903 = vpop.f32.mrb[0].mxu0
        %v904 = vadd.f32 0.0, %v903
        %v905 = vpop.f32.mrb[0].mxu0
        %v906 = vpop.f32.mrb[0].mxu0
        %v907 = vadd.f32 0.0, %v906
        %v908 = vpop.f32.mrb[0].mxu0
        %909 = vdwg.mxu0
        %p910 = scmp.eq.s32.totalorder %s35, 0
        // Predicated region
        $region93: #{tpu_custom_call.1} parent=55 // pred_check
          %p911 = pneg %p910
        $region94: #{tpu_custom_call.1} parent=55 // pred_check_branch
          %913 = sbr.rel (%p911) target = $region96
        $region95: #{tpu_custom_call.1} parent=55 // pred_region
          %914 = vst [vmem:[#allocation2] sm:$0xff] %v880
          %915 = vst [vmem:[#allocation2 + $0x8] sm:$0xff] %v883
          %916 = vst [vmem:[#allocation2 + $0x10] sm:$0xff] %v888
          %917 = vst [vmem:[#allocation2 + $0x18] sm:$0xff] %v891
          %918 = vst [vmem:[#allocation2 + $0x20] sm:$0xff] %v896
          %919 = vst [vmem:[#allocation2 + $0x28] sm:$0xff] %v899
          %920 = vst [vmem:[#allocation2 + $0x30] sm:$0xff] %v904
          %921 = vst [vmem:[#allocation2 + $0x38] sm:$0xff] %v907
        $region96: #{tpu_custom_call.1} parent=55 // pred_fallthru
          _
        %p922 = scmp.gt.s32.totalorder %s35, 0
        // Predicated region
        $region97: #{tpu_custom_call.1} parent=55 // pred_check
          %p923 = pneg %p922
        $region98: #{tpu_custom_call.1} parent=55 // pred_check_branch
          %925 = sbr.rel (%p923) target = $region100
        $region99: #{tpu_custom_call.1} parent=55 // pred_region
          %v926 = vld [vmem:[#allocation2] sm:$0xff]
          %v927 = vld [vmem:[#allocation2 + $0x8] sm:$0xff]
          %v928 = vld [vmem:[#allocation2 + $0x10] sm:$0xff]
          %v929 = vld [vmem:[#allocation2 + $0x18] sm:$0xff]
          %v930 = vld [vmem:[#allocation2 + $0x20] sm:$0xff]
          %v931 = vld [vmem:[#allocation2 + $0x28] sm:$0xff]
          %v932 = vld [vmem:[#allocation2 + $0x30] sm:$0xff]
          %v933 = vld [vmem:[#allocation2 + $0x38] sm:$0xff]
          %v934 = vadd.f32 %v926, %v880
          %v935 = vadd.f32 %v927, %v883
          %v936 = vadd.f32 %v928, %v888
          %v937 = vadd.f32 %v929, %v891
          %v938 = vadd.f32 %v930, %v896
          %v939 = vadd.f32 %v931, %v899
          %v940 = vadd.f32 %v932, %v904
          %v941 = vadd.f32 %v933, %v907
          %942 = vst [vmem:[#allocation2] sm:$0xff] %v934
          %943 = vst [vmem:[#allocation2 + $0x8] sm:$0xff] %v935
          %944 = vst [vmem:[#allocation2 + $0x10] sm:$0xff] %v936
          %945 = vst [vmem:[#allocation2 + $0x18] sm:$0xff] %v937
          %946 = vst [vmem:[#allocation2 + $0x20] sm:$0xff] %v938
          %947 = vst [vmem:[#allocation2 + $0x28] sm:$0xff] %v939
          %948 = vst [vmem:[#allocation2 + $0x30] sm:$0xff] %v940
          %949 = vst [vmem:[#allocation2 + $0x38] sm:$0xff] %v941
        $region100: #{tpu_custom_call.1} parent=55 // pred_fallthru
          _
        %p950 = scmp.eq.s32.totalorder %s35, 2
        // Predicated region
        $region101: #{tpu_custom_call.1} parent=55 // pred_check
          %p951 = pneg %p950
        $region102: #{tpu_custom_call.1} parent=55 // pred_check_branch
          %953 = sbr.rel (%p951) target = $region104
        $region103: #{tpu_custom_call.1} parent=55 // pred_region
          %v954 = vld [vmem:[#allocation2] sm:$0xff]
          %v955 = vld [vmem:[#allocation2 + $0x8] sm:$0xff]
          %v956 = vld [vmem:[#allocation2 + $0x10] sm:$0xff]
          %v957 = vld [vmem:[#allocation2 + $0x18] sm:$0xff]
          %v958 = vld [vmem:[#allocation2 + $0x20] sm:$0xff]
          %v959 = vld [vmem:[#allocation2 + $0x28] sm:$0xff]
          %v960 = vld [vmem:[#allocation2 + $0x30] sm:$0xff]
          %v961 = vld [vmem:[#allocation2 + $0x38] sm:$0xff]
          %v962 = vld [vmem:[#allocation14] sm:$0x1]
          %v964 = vlaneseq
          %v965 = vshrl.u32 %v964, 7
          %v966 = vsub.s32 0, %v965
          %v967 = vrot.slane %v962, %v966
          %v969 = vadd.f32 %v954, %v967
          %v970 = vadd.f32 %v955, %v967
          %v971 = vadd.f32 %v956, %v967
          %v972 = vadd.f32 %v957, %v967
          %v973 = vadd.f32 %v958, %v967
          %v974 = vadd.f32 %v959, %v967
          %v975 = vadd.f32 %v960, %v967
          %v976 = vadd.f32 %v961, %v967
          %v977 = vmax.f32 %v969, 0.0
          %v978 = vmax.f32 %v970, 0.0
          %v979 = vmax.f32 %v971, 0.0
          %v980 = vmax.f32 %v972, 0.0
          %v981 = vmax.f32 %v973, 0.0
          %v982 = vmax.f32 %v974, 0.0
          %v983 = vmax.f32 %v975, 0.0
          %v984 = vmax.f32 %v976, 0.0
          %v985 = vpack.c.bf16 %v978, %v977
          %v986 = vpack.c.bf16 %v980, %v979
          %v987 = vpack.c.bf16 %v982, %v981
          %v988 = vpack.c.bf16 %v984, %v983
          %v989 = vld [vmem:[#allocation15] sm:$0xf]
          %v990 = vld [vmem:[#allocation15 + $0x4] sm:$0xf]
          %v991 = vld [vmem:[#allocation15 + $0x8] sm:$0xf]
          %v992 = vld [vmem:[#allocation15 + $0xc] sm:$0xf]
          %v993 = vld [vmem:[#allocation15 + $0x10] sm:$0xf]
          %v994 = vld [vmem:[#allocation15 + $0x14] sm:$0xf]
          %v995 = vld [vmem:[#allocation15 + $0x18] sm:$0xf]
          %v996 = vld [vmem:[#allocation15 + $0x1c] sm:$0xf]
          %v997 = vld [vmem:[#allocation15 + $0x20] sm:$0xf]
          %v998 = vld [vmem:[#allocation15 + $0x24] sm:$0xf]
          %v999 = vld [vmem:[#allocation15 + $0x28] sm:$0xf]
          %v1000 = vld [vmem:[#allocation15 + $0x2c] sm:$0xf]
          %v1001 = vld [vmem:[#allocation15 + $0x30] sm:$0xf]
          %v1002 = vld [vmem:[#allocation15 + $0x34] sm:$0xf]
          %v1003 = vld [vmem:[#allocation15 + $0x38] sm:$0xf]
          %v1004 = vld [vmem:[#allocation15 + $0x3c] sm:$0xf]
          %v1005 = vld [vmem:[#allocation17] sm:$0x1]
          %v1007 = vlaneseq
          %v1008 = vshrl.u32 %v1007, 7
          %v1009 = vsub.s32 0, %v1008
          %v1010 = vrot.slane %v1005, %v1009
          %v1028 = vunpack.c.l.b16 %v989
          %v1029 = vunpack.c.l.b16 %v990
          %v1030 = vunpack.c.l.b16 %v991
          %v1031 = vunpack.c.l.b16 %v992
          %v1032 = vunpack.c.l.b16 %v993
          %v1033 = vunpack.c.l.b16 %v994
          %v1034 = vunpack.c.l.b16 %v995
          %v1035 = vunpack.c.l.b16 %v996
          %v1036 = vunpack.c.l.b16 %v997
          %v1037 = vunpack.c.l.b16 %v998
          %v1038 = vunpack.c.l.b16 %v999
          %v1039 = vunpack.c.l.b16 %v1000
          %v1040 = vunpack.c.l.b16 %v1001
          %v1041 = vunpack.c.l.b16 %v1002
          %v1042 = vunpack.c.l.b16 %v1003
          %v1043 = vunpack.c.l.b16 %v1004
          %v1044 = vpack.c.b16 %v1029, %v1028
          %v1045 = vpack.c.b16 %v1031, %v1030
          %v1046 = vpack.c.b16 %v1033, %v1032
          %v1047 = vpack.c.b16 %v1035, %v1034
          %v1048 = vpack.c.b16 %v1037, %v1036
          %v1049 = vpack.c.b16 %v1039, %v1038
          %v1050 = vpack.c.b16 %v1041, %v1040
          %v1051 = vpack.c.b16 %v1043, %v1042
          %1060 = vmatprep.subr.bf16.mxu0 0
          %1061 = vmatpush1.bf16.msra.mxu0 %v1044
          %1062 = vmatprep.subr.bf16.mxu0 0
          %1063 = vmatpush1.bf16.msra.mxu0 %v1045
          %1064 = vmatprep.subr.bf16.mxu0 0
          %1065 = vmatpush1.bf16.msra.mxu0 %v1046
          %1066 = vmatprep.subr.bf16.mxu0 0
          %1067 = vmatpush1.bf16.msra.mxu0 %v1047
          %1068 = vmatprep.subr.bf16.mxu0 0
          %1069 = vmatpush1.bf16.msra.mxu0 %v1048
          %1070 = vmatprep.subr.bf16.mxu0 0
          %1071 = vmatpush1.bf16.msra.mxu0 %v1049
          %1072 = vmatprep.subr.bf16.mxu0 0
          %1073 = vmatpush1.bf16.msra.mxu0 %v1050
          %1074 = vmatprep.subr.bf16.mxu0 0
          %1075 = vmatpush1.bf16.msra.mxu0 %v1051
          %1076 = vmatprep.subr.bf16.mxu0 0
          %1077 = vmatpush1.bf16.msra.mxu0 0
          %1078 = vmatprep.subr.bf16.mxu0 0
          %1079 = vmatpush1.bf16.msra.mxu0 0
          %1080 = vmatprep.subr.bf16.mxu0 0
          %1081 = vmatpush1.bf16.msra.mxu0 0
          %1082 = vmatprep.subr.bf16.mxu0 0
          %1083 = vmatpush1.bf16.msra.mxu0 0
          %1084 = vmatprep.subr.bf16.mxu0 0
          %1085 = vmatpush1.bf16.msra.mxu0 0
          %1086 = vmatprep.subr.bf16.mxu0 0
          %1087 = vmatpush1.bf16.msra.mxu0 0
          %1088 = vmatprep.subr.bf16.mxu0 0
          %1089 = vmatpush1.bf16.msra.mxu0 0
          %1090 = vmatprep.subr.bf16.mxu0 0
          %1091 = vmatpush1.bf16.msra.mxu0 0
          %1092 = vmatprep.mubr.bf16.mxu0 0
          %1093 = vmatmul.mubr.bf16.gmra.mrb[0].mxu0 %v985
          %v1094 = vpop.f32.mrb[0].mxu0
          %v1095 = vadd.f32 %v1010, %v1094
          %v1096 = vpop.f32.mrb[0].mxu0
          %v1097 = vpop.f32.mrb[0].mxu0
          %v1098 = vadd.f32 %v1010, %v1097
          %v1099 = vpop.f32.mrb[0].mxu0
          %1100 = vmatprep.mubr.bf16.mxu0 0
          %1101 = vmatmul.mubr.bf16.gmra.mrb[0].mxu0 %v986
          %v1102 = vpop.f32.mrb[0].mxu0
          %v1103 = vadd.f32 %v1010, %v1102
          %v1104 = vpop.f32.mrb[0].mxu0
          %v1105 = vpop.f32.mrb[0].mxu0
          %v1106 = vadd.f32 %v1010, %v1105
          %v1107 = vpop.f32.mrb[0].mxu0
          %1108 = vmatprep.mubr.bf16.mxu0 0
          %1109 = vmatmul.mubr.bf16.gmra.mrb[0].mxu0 %v987
          %v1110 = vpop.f32.mrb[0].mxu0
          %v1111 = vadd.f32 %v1010, %v1110
          %v1112 = vpop.f32.mrb[0].mxu0
          %v1113 = vpop.f32.mrb[0].mxu0
          %v1114 = vadd.f32 %v1010, %v1113
          %v1115 = vpop.f32.mrb[0].mxu0
          %1116 = vmatprep.mubr.bf16.mxu0 0
          %1117 = vmatmul.mubr.bf16.gmra.mrb[0].mxu0 %v988
          %v1118 = vpop.f32.mrb[0].mxu0
          %v1119 = vadd.f32 %v1010, %v1118
          %v1120 = vpop.f32.mrb[0].mxu0
          %v1121 = vpop.f32.mrb[0].mxu0
          %v1122 = vadd.f32 %v1010, %v1121
          %v1123 = vpop.f32.mrb[0].mxu0
          %1124 = vdwg.mxu0
          %1125 = vst [vmem:[%s478] sm:$0xff] %v1095
          %1126 = vst [vmem:[%s478 + $0x8] sm:$0xff] %v1098
          %1127 = vst [vmem:[%s478 + $0x10] sm:$0xff] %v1103
          %1128 = vst [vmem:[%s478 + $0x18] sm:$0xff] %v1106
          %1129 = vst [vmem:[%s478 + $0x20] sm:$0xff] %v1111
          %1130 = vst [vmem:[%s478 + $0x28] sm:$0xff] %v1114
          %1131 = vst [vmem:[%s478 + $0x30] sm:$0xff] %v1119
          %1132 = vst [vmem:[%s478 + $0x38] sm:$0xff] %v1122
        $region104: #{tpu_custom_call.1} parent=55 // pred_fallthru
          _
        %s1133 = sand.u32 %s246, 1
        %s1134 = scalar_lea.sflag [#allocation5], %s1133
        %s1135 = sand.u32 %s246, 1
        %s1136 = smul.addr %s1135, 64
        %s1137 = scalar_lea.vmem [#allocation18], %s1136
        // Predicated region
        $region105: #{tpu_custom_call.1} parent=55 // pred_check
          %p1138 = pneg %p256
        $region106: #{tpu_custom_call.1} parent=55 // pred_check_branch
          %1140 = sbr.rel (%p1138) target = $region108
        $region107: #{tpu_custom_call.1} parent=55 // pred_region
          %s1141 = smul.u32 8, %s34
          %s1143 = ssub.s32 1024, 1024
          %1144 = vsyncadd %s1134, %s1143
          %s1145 = smul.addr %s1141, 128
          %s1146 = scalar_lea.hbm %s9, %s1145
          %s1147 = sshll.u32 %s1137, 4
          %s1148 = int_to_ptr.vmem [resolvable:$true] %s1147
          %1153 = dma.vmem_to_hbm [thread:$0]  %s1148, 1024, %s1146, %s1134, 128, 128, 8
        $region108: #{tpu_custom_call.1} parent=55 // pred_fallthru
          _
      $region56: #{tpu_custom_call.1} parent=5 // pred_fallthru
        _
      %p1154 = scmp.le.s32.totalorder 2, %s25
      // Predicated region
      $region109: #{tpu_custom_call.1} parent=5 // pred_check
        %p1155 = pneg %p1154
      $region110: #{tpu_custom_call.1} parent=5 // pred_check_branch
        %1157 = sbr.rel (%p1155) target = $region112
      $region111: #{tpu_custom_call.1} parent=5 // pred_region
        %s1158 = ssub.s32 %s25, 2
        // Predicated region
        $region113: #{tpu_custom_call.1} parent=111 // pred_check
          %p1159 = pneg %p262
        $region114: #{tpu_custom_call.1} parent=111 // pred_check_branch
          %1161 = sbr.rel (%p1159) target = $region116
        $region115: #{tpu_custom_call.1} parent=111 // pred_region
          %s1162 = sand.u32 %s247, 1
          %s1163 = scalar_lea.sflag [#allocation5], %s1162
          %s1164 = sand.u32 %s247, 1
          %s1165 = smul.addr %s1164, 64
          %s1166 = scalar_lea.vmem [#allocation18], %s1165
          %1167 = dma.done %s1163, 1024
        $region116: #{tpu_custom_call.1} parent=111 // pred_fallthru
          _
      $region112: #{tpu_custom_call.1} parent=5 // pred_fallthru
        _
    $region6: #{tpu_custom_call.1} parent=1 // loop_footer
      %s29 = sadd.s32 1, %s25
    $region7: #{tpu_custom_call.1} parent=1 // loop_footer_branch
      %24 = sbr.rel target = $region3
    $region8: #{tpu_custom_call.1} parent=1 // loop_exit
      _
    %1168 = vsyncpa [#allocation4], 1
    %s1169 = scalar_lea.sflag [#allocation4], 1
    %1170 = vsyncpa %s1169, 1
    %1171 = vsyncpa [#allocation7], 1
    %1172 = vsyncpa [#allocation10], 1
    %1173 = vsyncpa [#allocation13], 1
    %1174 = vsyncpa [#allocation16], 1
    %1175 = vsyncpa [#allocation5], 1
    %s1176 = scalar_lea.sflag [#allocation5], 1
    %1177 = vsyncpa %s1176, 1

</llo_original>
